<compile_context>
chip_gen: v7x
topology: tpu7x:2x2x1
jax: 0.10.0
libtpu: 0.0.40
codegen_flags: <defaults>
</compile_context>

<pallas_src>
import functools

import jax
import jax.numpy as jnp
from jax.experimental import pallas as pl
from jax.experimental.pallas import tpu as pltpu


def _round_up(x, m):
    return (x + m - 1) // m * m


# ----------------------------- kernels -------------------------------------


def _fused_kernel(x_ref, w_ref, b_ref, o_ref, *, input_factor, tn, compute_dtype):
    """Full-K path: one (tm, tn) output tile of x @ (W^T*mf) + (b*mf) + x*if.

    x rows (tm, H) stay resident across the output-column axis j.
    """
    j = pl.program_id(1)
    x = x_ref[...]
    y = jnp.dot(x.astype(compute_dtype), w_ref[...],
                preferred_element_type=jnp.float32)
    y = y + b_ref[...]                              # f32 bias, already *module_factor
    off = pl.multiple_of(j * tn, tn)
    x_res = x_ref[:, pl.ds(off, tn)]                # residual cols from resident tile
    o_ref[...] = (y + x_res.astype(jnp.float32) * input_factor).astype(o_ref.dtype)


def _ktiled_kernel(x_ref, xr_ref, w_ref, b_ref, o_ref, acc_ref, *,
                   input_factor, compute_dtype):
    """K-tiled path: f32 VMEM accumulator; bias + residual in the finalize step."""
    k = pl.program_id(2)

    @pl.when(k == 0)
    def _():
        acc_ref[...] = jnp.zeros_like(acc_ref)

    acc_ref[...] += jnp.dot(x_ref[...].astype(compute_dtype), w_ref[...],
                            preferred_element_type=jnp.float32)

    @pl.when(k == pl.num_programs(2) - 1)
    def _():
        y = acc_ref[...] + b_ref[...]
        o_ref[...] = (y + xr_ref[...].astype(jnp.float32) * input_factor
                      ).astype(o_ref.dtype)


# ----------------------------- wrapper --------------------------------------


def prepare_residual_linear_params(weight, bias, module_factor, *, weight_dtype=None):
    """Done ONCE, outside the hot path: fold the transpose and module_factor.

    weight: torch-style (H_out, H_in). Returns:
      w_t: (H_in, H_out) = weight.T * module_factor   (optionally cast, e.g. bf16)
      b:   (1, H_out) f32 = bias * module_factor      (epilogue stays f32)
    """
    w_t = weight.T * jnp.float32(module_factor)
    if weight_dtype is not None:
        w_t = w_t.astype(weight_dtype)
    b = (bias.astype(jnp.float32) * jnp.float32(module_factor)).reshape(1, -1)
    return w_t, b


def _pick_tile(H, prefs=(512, 384, 256, 128)):
    if H % 128 != 0:
        return H
    for cand in prefs:
        if H % cand == 0:
            return cand
    return H


def residual_linear_block(x, w_t, b, input_factor, *, tm=512, tk=None):
    """x: (B, S, H); w_t: (H, H) pre-transposed & module_factor-folded; b: (1, H) f32."""
    B, S, H = x.shape
    Hin, Hout = w_t.shape
    assert H == Hin and Hin == Hout, "residual add requires a square Linear"
    M = B * S
    x2d = x.reshape(M, H)

    # ---- row tile: large, but keep >=2 grid steps when possible (megacore) ----
    tm_eff = min(tm, _round_up(M, 8))
    if M <= tm_eff and tm_eff > 8:
        tm_eff = max(8, _round_up(pl.cdiv(M, 2), 8))
    M_pad = _round_up(M, tm_eff)
    if M_pad != M:
        x2d = jnp.pad(x2d, ((0, M_pad - M), (0, 0)))

    # ---- output-column tile: largest divisor of H that is a multiple of 128 ----
    tn = _pick_tile(H)

    xb = jnp.dtype(x.dtype).itemsize
    wb = jnp.dtype(w_t.dtype).itemsize
    ob = jnp.dtype(x.dtype).itemsize

    # ---- choose path: fused full-K vs K-tiled accumulator (VMEM budget) --------
    fused_need = 2 * (tm_eff * H * xb + H * tn * wb + tn * 4 + tm_eff * tn * ob)
    vmem_budget = 40 << 20                          # headroom under v7x 64 MiB
    use_ktile = (tk is not None) or (fused_need > vmem_budget)
    if H % 128 != 0:
        use_ktile = False                           # blocks must equal full dim
    if use_ktile:
        tk_eff = tk if (tk is not None and H % tk == 0 and tk % 128 == 0) \
            else _pick_tile(H)

    kernel_common = dict(input_factor=float(input_factor), compute_dtype=w_t.dtype)

    if not use_ktile:
        need = fused_need
        vmem_limit = int(min(max(need + (8 << 20), 32 << 20), 64 << 20))
        grid = (M_pad // tm_eff, H // tn)
        call = pl.pallas_call(
            functools.partial(_fused_kernel, tn=tn, **kernel_common),
            out_shape=jax.ShapeDtypeStruct((M_pad, H), x.dtype),
            grid_spec=pltpu.PrefetchScalarGridSpec(
                num_scalar_prefetch=0,
                grid=grid,
                in_specs=[
                    pl.BlockSpec((tm_eff, H), lambda i, j: (i, 0)),   # x rows, full K
                    pl.BlockSpec((H, tn), lambda i, j: (0, j)),       # weight col tile
                    pl.BlockSpec((1, tn), lambda i, j: (0, j)),       # scaled bias (f32)
                ],
                out_specs=pl.BlockSpec((tm_eff, tn), lambda i, j: (i, j)),
            ),
            compiler_params=pltpu.CompilerParams(
                dimension_semantics=("parallel", "parallel"),
                vmem_limit_bytes=vmem_limit,
            ),
        )
        out2d = call(x2d, w_t, b)
    else:
        need = (2 * (tm_eff * tk_eff * xb + tm_eff * tn * xb + tk_eff * tn * wb
                     + tn * 4 + tm_eff * tn * ob)
                + tm_eff * tn * 4)                  # + f32 accumulator scratch
        vmem_limit = int(min(max(need + (8 << 20), 32 << 20), 64 << 20))
        grid = (M_pad // tm_eff, H // tn, H // tk_eff)
        call = pl.pallas_call(
            functools.partial(_ktiled_kernel, **kernel_common),
            out_shape=jax.ShapeDtypeStruct((M_pad, H), x.dtype),
            grid_spec=pltpu.PrefetchScalarGridSpec(
                num_scalar_prefetch=0,
                grid=grid,
                in_specs=[
                    pl.BlockSpec((tm_eff, tk_eff), lambda i, j, k: (i, k)),  # x K tile
                    pl.BlockSpec((tm_eff, tn), lambda i, j, k: (i, j)),      # residual
                    pl.BlockSpec((tk_eff, tn), lambda i, j, k: (k, j)),      # weight
                    pl.BlockSpec((1, tn), lambda i, j, k: (0, j)),           # bias
                ],
                out_specs=pl.BlockSpec((tm_eff, tn), lambda i, j, k: (i, j)),
                scratch_shapes=[pltpu.VMEM((tm_eff, tn), jnp.float32)],
            ),
            compiler_params=pltpu.CompilerParams(
                dimension_semantics=("parallel", "parallel", "arbitrary"),
                vmem_limit_bytes=vmem_limit,
            ),
        )
        out2d = call(x2d, x2d, w_t, b)

    if M_pad != M:
        out2d = out2d[:M]
    return out2d.reshape(B, S, H)


# ----------------------------- self-test ------------------------------------


def _reference(x, weight, bias, module_factor, input_factor):
    return (jnp.einsum("bsh,oh->bso", x, weight) + bias) * module_factor \
        + x * input_factor


if __name__ == "__main__":
    key = jax.random.PRNGKey(0)
    module_factor = 0.5
    input_factor = 1.0

    # ---- small shapes: batch=2, seq=8, hidden=128 (fused full-K path) ----
    B, S, H = 2, 8, 128
    kx, kw, kb, key = jax.random.split(key, 4)
    x = jax.random.normal(kx, (B, S, H), dtype=jnp.float32)
    weight = jax.random.normal(kw, (H, H), dtype=jnp.float32) * (1.0 / (H ** 0.5))
    bias = jax.random.normal(kb, (H,), dtype=jnp.float32) * 0.01
    ref = _reference(x, weight, bias, module_factor, input_factor)

    w_t, b = prepare_residual_linear_params(weight, bias, module_factor)
    out = jax.block_until_ready(residual_linear_block(x, w_t, b, input_factor))
    assert out.shape == (B, S, H)
    assert jnp.allclose(out, ref, atol=1e-4, rtol=1e-4), "f32 fused mismatch"

    # bf16-weight path (bf16 MXU matmul, f32 accumulate + f32 epilogue)
    w_t16, b16 = prepare_residual_linear_params(
        weight, bias, module_factor, weight_dtype=jnp.bfloat16)
    out16 = jax.block_until_ready(residual_linear_block(x, w_t16, b16, input_factor))
    assert jnp.allclose(out16, ref, atol=1e-1, rtol=1e-1), "bf16 fused mismatch"

    # ---- K-tiled accumulator path (forced tk < H) ----
    H2 = 256
    kx, kw, kb, key = jax.random.split(key, 4)
    x2 = jax.random.normal(kx, (B, S, H2), dtype=jnp.float32)
    weight2 = jax.random.normal(kw, (H2, H2), dtype=jnp.float32) * (1.0 / (H2 ** 0.5))
    bias2 = jax.random.normal(kb, (H2,), dtype=jnp.float32) * 0.01
    ref2 = _reference(x2, weight2, bias2, module_factor, input_factor)

    w_t2, b2 = prepare_residual_linear_params(weight2, bias2, module_factor)
    out2 = jax.block_until_ready(
        residual_linear_block(x2, w_t2, b2, input_factor, tk=128))
    assert out2.shape == (B, S, H2)
    assert jnp.allclose(out2, ref2, atol=1e-4, rtol=1e-4), "f32 K-tiled mismatch"

    print("KERNEL_OK")
</pallas_src>

<mosaic_0001>
module attributes {stable_mosaic.version = 11 : i64} {
  func.func @_fused_kernel(%arg0: i32, %arg1: i32, %arg2: memref<8x128xf32, #tpu.memory_space<vmem>>, %arg3: memref<128x128xf32, #tpu.memory_space<vmem>>, %arg4: memref<1x128xf32, #tpu.memory_space<vmem>>, %arg5: memref<8x128xf32, #tpu.memory_space<vmem>>) attributes {dimension_semantics = [#tpu.dimension_semantics<parallel>, #tpu.dimension_semantics<parallel>], iteration_bounds = array<i64: 2, 1>, scalar_prefetch = 0 : i64, scratch_operands = 0 : i64, tpu.core_type = #tpu.core_type<tc>, window_params = [{transform_indices = @transform_0, window_bounds = array<i64: 8, 128>}, {transform_indices = @transform_1, window_bounds = array<i64: 128, 128>}, {transform_indices = @transform_2, window_bounds = array<i64: 1, 128>}, {transform_indices = @transform_3, window_bounds = array<i64: 8, 128>}]} {
    %c0 = arith.constant 0 : index
    %c0_0 = arith.constant 0 : index
    %0 = vector.load %arg2[%c0, %c0_0] : memref<8x128xf32, #tpu.memory_space<vmem>>, vector<8x128xf32>
    %c0_1 = arith.constant 0 : index
    %c0_2 = arith.constant 0 : index
    %1 = vector.load %arg3[%c0_1, %c0_2] : memref<128x128xf32, #tpu.memory_space<vmem>>, vector<128x128xf32>
    %cst = arith.constant dense<0.000000e+00> : vector<8x128xf32>
    %2 = tpu.matmul %0, %1, %cst {dimension_numbers = #tpu.dot_dimension_numbers<[1], [0], [0], [1], [0, 0, 1, 1], [], []>} : vector<8x128xf32>, vector<128x128xf32>, vector<8x128xf32> -> vector<8x128xf32>
    %c0_3 = arith.constant 0 : index
    %c0_4 = arith.constant 0 : index
    %3 = vector.load %arg4[%c0_3, %c0_4] : memref<1x128xf32, #tpu.memory_space<vmem>>, vector<1x128xf32>
    %4 = vector.broadcast %3 : vector<1x128xf32> to vector<8x128xf32>
    %5 = arith.addf %2, %4 : vector<8x128xf32>
    %c128_i32 = arith.constant 128 : i32
    %6 = arith.muli %arg1, %c128_i32 : i32
    %7 = tpu.assume_multiple %6, 128 : i32
    %c0_5 = arith.constant 0 : index
    %8 = arith.index_cast %7 : i32 to index
    %9 = vector.load %arg2[%c0_5, %8] : memref<8x128xf32, #tpu.memory_space<vmem>>, vector<8x128xf32>
    %cst_6 = arith.constant 1.000000e+00 : f32
    %10 = vector.broadcast %cst_6 : f32 to vector<8x128xf32>
    %11 = arith.mulf %9, %10 : vector<8x128xf32>
    %12 = arith.addf %5, %11 : vector<8x128xf32>
    %c0_7 = arith.constant 0 : index
    %c0_8 = arith.constant 0 : index
    %13 = vector.load %arg5[%c0_7, %c0_8] : memref<8x128xf32, #tpu.memory_space<vmem>>, vector<8x128xf32>
    tpu.vector_store %arg5[%c0_7, %c0_8], %12 {strides = array<i32>} : memref<8x128xf32, #tpu.memory_space<vmem>>, vector<8x128xf32>,
    return
  }
  func.func @transform_0(%arg0: i32, %arg1: i32) -> (i32, i32) {
    %c0_i32 = arith.constant 0 : i32
    %c0_i32_0 = arith.constant 0 : i32
    return %arg0, %c0_i32 : i32, i32
  }
  func.func @transform_1(%arg0: i32, %arg1: i32) -> (i32, i32) {
    %c0_i32 = arith.constant 0 : i32
    %c0_i32_0 = arith.constant 0 : i32
    return %c0_i32, %arg1 : i32, i32
  }
  func.func @transform_2(%arg0: i32, %arg1: i32) -> (i32, i32) {
    %c0_i32 = arith.constant 0 : i32
    %c0_i32_0 = arith.constant 0 : i32
    return %c0_i32, %arg1 : i32, i32
  }
  func.func @transform_3(%arg0: i32, %arg1: i32) -> (i32, i32) {
    %c0_i32 = arith.constant 0 : i32
    return %arg0, %arg1 : i32, i32
  }
}

</mosaic_0001>

<llo_original>
// kernel: tpu_custom_call.1
$region0: #{tpu_custom_call.1}
  #allocation0 [shape = 'u32[]', space=smem, size = 0x4, offset = 0x4, fixed_abs, tag = 'smem constant byte address 0x4 - core index']
  #allocation1 [shape = 'u32[144,128]{1,0:T(1,128)}', space=vmem, size = 0x12000, scoped, tag = 'internal scratch']
  %s0 = inlined_call_operand.hbm [shape: f32[16,128], index: 0, kind: input, shape index: {}]
  %s1 = inlined_call_operand.hbm [shape: f32[128,128], index: 1, kind: input, shape index: {}]
  %s2 = inlined_call_operand.vmem [shape: f32[1,128], index: 2, kind: input, shape index: {}]
  %s3 = inlined_call_operand.hbm [shape: f32[16,128], index: 3, kind: output, shape index: {}]
  %s4 = sld [smem:[#allocation0]]
  $region53: #{tpu_custom_call.1} parent=0
    _
  %s6 = ssub.s32 1, %s4
  %s7 = scalar_select 0, %s6, %s4
  $region1: #{tpu_custom_call.1} parent=0
    #allocation2 [shape = 'u8[8192]{0}', space=vmem, size = 0x2000, scoped, tag = 'input window, operand 0']
    #allocation3 [shape = 's32[2]{0}', space=sflag, size = 0x8, scoped, tag = 'scoped memory for tpu_custom_call.1']
    #allocation4 [shape = 's32[2]{0}', space=sflag, size = 0x8, scoped, tag = 'scoped memory for tpu_custom_call.1']
    #allocation5 [shape = 'u8[65536]{0}', space=vmem, size = 0x10000, scoped, tag = 'input window, operand 1, single buffered']
    #allocation6 [shape = 's32[1]{0}', space=sflag, size = 0x4, scoped, tag = 'scoped memory for tpu_custom_call.1']
    #allocation7 [shape = 'u8[8192]{0}', space=vmem, size = 0x2000, scoped, tag = 'output window, operand 0']
    %8 = vsyncpa [#allocation3], 0
    %s9 = scalar_lea.sflag [#allocation3], 1
    %10 = vsyncpa %s9, 0
    %11 = vsyncpa [#allocation6], 0
    %12 = vsyncpa [#allocation4], 0
    %s13 = scalar_lea.sflag [#allocation4], 1
    %14 = vsyncpa %s13, 0
    loop: start=0, step=1, limit=4
    $region2: #{tpu_custom_call.1} parent=1 // loop_pre_header
      _
    $region3: #{tpu_custom_call.1} parent=1 // loop_header
      %s16 = sphi 0, %s20
      %p17 = scmp.ge.s32.totalorder %s16, 4
      %s23 = sphi 0, %s35
      %s24 = sphi 0, %s31
      %s25 = sphi 0, %s23
      %s26 = sphi 0, %s24
      %s27 = sphi 0, %s25
      %s28 = sphi 0, %s26
      %s38 = sphi 0, %s40
      %s41 = sphi 0, %s38
      %s42 = sphi 0, %s41
      %s58 = sphi 0, %s42
      %s64 = sphi 0, %s66
      %s67 = sphi 0, %s64
      %s68 = sphi 0, %s67
      %s84 = sphi 0, %s68
      %s90 = sphi 0, %s92
      %s93 = sphi 0, %s90
      %s94 = sphi 0, %s93
      %s110 = sphi 0, %s94
      %s118 = sphi 0, %s120
      %s121 = sphi 0, %s118
      %s122 = sphi 0, %s121
      %s138 = sphi 0, %s122
    $region4: #{tpu_custom_call.1} parent=1 // loop_header_branch
      %19 = sbr.rel (%p17) target = $region8
    $region5: #{tpu_custom_call.1} parent=1 // loop_body
      %s21 = ssub.s32 %s16, 1
      %s22 = ssub.s32 %s16, 2
      %s29 = sadd.s32 1, %s24
      %p30 = scmp.ge.s32.totalorder %s29, 1
      %s31 = scalar_select %p30, 0, %s29
      %s32 = sadd.s32 1, %s23
      %s33 = scalar_select %p30, %s32, %s23
      %p34 = scmp.ge.s32.totalorder %s33, 2
      %s35 = scalar_select %p34, 0, %s33
      %s36 = ssub.s32 %s23, %s35
      %p37 = scmp.eq.s32.totalorder %s36, 0
      %s39 = sadd.s32 %s38, 1
      %s40 = scalar_select %p37, %s38, %s39
      %p43 = pneg %p37
      %p44 = scmp.eq.s32.totalorder %s16, 1
      %p45 = por %p43, %p44
      %p46 = scmp.ne.s32.totalorder %s38, %s41
      %p47 = scmp.eq.s32.totalorder %s16, 0
      %p48 = por %p46, %p47
      %p49 = scmp.ne.s32.totalorder %s38, %s41
      %p50 = scmp.eq.s32.totalorder %s21, 1
      %p51 = por %p49, %p50
      %p52 = scmp.ne.s32.totalorder %s41, %s42
      %p53 = scmp.eq.s32.totalorder %s21, 0
      %p54 = por %p52, %p53
      %p55 = scmp.ne.s32.totalorder %s41, %s42
      %p56 = scmp.eq.s32.totalorder %s22, 1
      %p57 = por %p55, %p56
      %p59 = scmp.ne.s32.totalorder %s42, %s58
      %p60 = scmp.eq.s32.totalorder %s22, 0
      %p61 = por %p59, %p60
      %s62 = ssub.s32 %s24, %s31
      %p63 = scmp.eq.s32.totalorder %s62, 0
      %s65 = sadd.s32 %s64, 1
      %s66 = scalar_select %p63, %s64, %s65
      %p69 = pneg %p63
      %p70 = scmp.eq.s32.totalorder %s16, 1
      %p71 = por %p69, %p70
      %p72 = scmp.ne.s32.totalorder %s64, %s67
      %p73 = scmp.eq.s32.totalorder %s16, 0
      %p74 = por %p72, %p73
      %p75 = scmp.ne.s32.totalorder %s64, %s67
      %p76 = scmp.eq.s32.totalorder %s21, 1
      %p77 = por %p75, %p76
      %p78 = scmp.ne.s32.totalorder %s67, %s68
      %p79 = scmp.eq.s32.totalorder %s21, 0
      %p80 = por %p78, %p79
      %p81 = scmp.ne.s32.totalorder %s67, %s68
      %p82 = scmp.eq.s32.totalorder %s22, 1
      %p83 = por %p81, %p82
      %p85 = scmp.ne.s32.totalorder %s68, %s84
      %p86 = scmp.eq.s32.totalorder %s22, 0
      %p87 = por %p85, %p86
      %s88 = ssub.s32 %s24, %s31
      %p89 = scmp.eq.s32.totalorder %s88, 0
      %s91 = sadd.s32 %s90, 1
      %s92 = scalar_select %p89, %s90, %s91
      %p95 = pneg %p89
      %p96 = scmp.eq.s32.totalorder %s16, 1
      %p97 = por %p95, %p96
      %p98 = scmp.ne.s32.totalorder %s90, %s93
      %p99 = scmp.eq.s32.totalorder %s16, 0
      %p100 = por %p98, %p99
      %p101 = scmp.ne.s32.totalorder %s90, %s93
      %p102 = scmp.eq.s32.totalorder %s21, 1
      %p103 = por %p101, %p102
      %p104 = scmp.ne.s32.totalorder %s93, %s94
      %p105 = scmp.eq.s32.totalorder %s21, 0
      %p106 = por %p104, %p105
      %p107 = scmp.ne.s32.totalorder %s93, %s94
      %p108 = scmp.eq.s32.totalorder %s22, 1
      %p109 = por %p107, %p108
      %p111 = scmp.ne.s32.totalorder %s94, %s110
      %p112 = scmp.eq.s32.totalorder %s22, 0
      %p113 = por %p111, %p112
      %s114 = ssub.s32 %s23, %s35
      %s115 = ssub.s32 %s24, %s31
      %s116 = sor.u32 %s114, %s115
      %p117 = scmp.eq.s32.totalorder %s116, 0
      %s119 = sadd.s32 %s118, 1
      %s120 = scalar_select %p117, %s118, %s119
      %p123 = pneg %p117
      %p124 = scmp.eq.s32.totalorder %s16, 1
      %p125 = por %p123, %p124
      %p126 = scmp.ne.s32.totalorder %s118, %s121
      %p127 = scmp.eq.s32.totalorder %s16, 0
      %p128 = por %p126, %p127
      %p129 = scmp.ne.s32.totalorder %s118, %s121
      %p130 = scmp.eq.s32.totalorder %s21, 1
      %p131 = por %p129, %p130
      %p132 = scmp.ne.s32.totalorder %s121, %s122
      %p133 = scmp.eq.s32.totalorder %s21, 0
      %p134 = por %p132, %p133
      %p135 = scmp.ne.s32.totalorder %s121, %s122
      %p136 = scmp.eq.s32.totalorder %s22, 1
      %p137 = por %p135, %p136
      %p139 = scmp.ne.s32.totalorder %s122, %s138
      %p140 = scmp.eq.s32.totalorder %s22, 0
      %p141 = por %p139, %p140
      %p142 = scmp.le.s32.totalorder 1, %s16
      %p143 = scmp.lt.s32.totalorder %s16, 3
      %p144 = pnand %p142, %p143
      %p145 = pneg %p144
      // Predicated region
      $region9: #{tpu_custom_call.1} parent=5 // pred_check
        _
      $region10: #{tpu_custom_call.1} parent=5 // pred_check_branch
        %147 = sbr.rel (%p144) target = $region12
      $region11: #{tpu_custom_call.1} parent=5 // pred_region
        %s148 = ssub.s32 %s16, 1
        // Predicated region
        $region13: #{tpu_custom_call.1} parent=11 // pred_check
          %p149 = pneg %p80
        $region14: #{tpu_custom_call.1} parent=11 // pred_check_branch
          %151 = sbr.rel (%p149) target = $region16
        $region15: #{tpu_custom_call.1} parent=11 // pred_region
          %s153 = ssub.s32 2048, 2048
          %154 = vsyncadd [#allocation6], %s153
          %s155 = smul.addr %s26, 128
          %s156 = scalar_lea.hbm %s1, %s155
          %s157 = sshll.u32 [#allocation5], 4
          %s158 = int_to_ptr.vmem [resolvable:$true] %s157
          %163 = dma.hbm_to_vmem [thread:$0]  %s156, 2048, %s158, [#allocation6], 128, 128, 8
        $region16: #{tpu_custom_call.1} parent=11 // pred_fallthru
          _
        // Predicated region
        $region17: #{tpu_custom_call.1} parent=11 // pred_check
          %p164 = pneg %p106
        $region18: #{tpu_custom_call.1} parent=11 // pred_check_branch
          %166 = sbr.rel (%p164) target = $region20
        $region19: #{tpu_custom_call.1} parent=11 // pred_region
          %p167 = scmp.lt.s32.totalorder %s26, 0
          %s168 = scalar_select %p167, %s26, 0
          %s169 = scalar_lea.vmem %s2, %s168
        $region20: #{tpu_custom_call.1} parent=11 // pred_fallthru
          _
      $region12: #{tpu_custom_call.1} parent=5 // pred_fallthru
        _
      %p170 = scmp.lt.s32.totalorder %s16, 2
      // Predicated region
      $region21: #{tpu_custom_call.1} parent=5 // pred_check
        %p171 = pneg %p170
      $region22: #{tpu_custom_call.1} parent=5 // pred_check_branch
        %173 = sbr.rel (%p171) target = $region24
      $region23: #{tpu_custom_call.1} parent=5 // pred_region
        // Predicated region
        $region25: #{tpu_custom_call.1} parent=23 // pred_check
          %p174 = pneg %p48
        $region26: #{tpu_custom_call.1} parent=23 // pred_check_branch
          %176 = sbr.rel (%p174) target = $region28
        $region27: #{tpu_custom_call.1} parent=23 // pred_region
          %s177 = sand.u32 %s38, 1
          %s178 = scalar_lea.sflag [#allocation3], %s177
          %s179 = sand.u32 %s38, 1
          %s180 = smul.addr %s179, 8
          %s181 = scalar_lea.vmem [#allocation2], %s180
          %s183 = ssub.s32 128, 128
          %184 = vsyncadd %s178, %s183
          %s185 = smul.addr %s23, 128
          %s186 = scalar_lea.hbm %s0, %s185
          %s188 = sshll.u32 %s181, 4
          %s189 = int_to_ptr.vmem [resolvable:$true] %s188
          %191 = dma.hbm_to_vmem [thread:$0]  %s186, 128, %s189, %s178
        $region28: #{tpu_custom_call.1} parent=23 // pred_fallthru
          _
      $region24: #{tpu_custom_call.1} parent=5 // pred_fallthru
        _
      %p192 = scmp.le.s32.totalorder 1, %s16
      %p193 = scmp.lt.s32.totalorder %s16, 3
      %p194 = pnand %p192, %p193
      %p195 = pneg %p194
      // Predicated region
      $region29: #{tpu_custom_call.1} parent=5 // pred_check
        _
      $region30: #{tpu_custom_call.1} parent=5 // pred_check_branch
        %197 = sbr.rel (%p194) target = $region32
      $region31: #{tpu_custom_call.1} parent=5 // pred_region
        %s198 = ssub.s32 %s16, 1
        %s199 = sand.u32 %s41, 1
        %s200 = scalar_lea.sflag [#allocation3], %s199
        %s201 = sand.u32 %s41, 1
        %s202 = smul.addr %s201, 8
        %s203 = scalar_lea.vmem [#allocation2], %s202
        // Predicated region
        $region33: #{tpu_custom_call.1} parent=31 // pred_check
          %p204 = pneg %p54
        $region34: #{tpu_custom_call.1} parent=31 // pred_check_branch
          %206 = sbr.rel (%p204) target = $region36
        $region35: #{tpu_custom_call.1} parent=31 // pred_region
          %207 = dma.done %s200, 128
        $region36: #{tpu_custom_call.1} parent=31 // pred_fallthru
          _
        // Predicated region
        $region37: #{tpu_custom_call.1} parent=31 // pred_check
          %p208 = pneg %p80
        $region38: #{tpu_custom_call.1} parent=31 // pred_check_branch
          %210 = sbr.rel (%p208) target = $region40
        $region39: #{tpu_custom_call.1} parent=31 // pred_region
          %211 = dma.done [#allocation6], 2048
        $region40: #{tpu_custom_call.1} parent=31 // pred_fallthru
          _
        %s212 = sand.u32 %s41, 1
        %s213 = scalar_lea.sflag [#allocation3], %s212
        %s214 = sand.u32 %s41, 1
        %s215 = smul.addr %s214, 8
        %s216 = scalar_lea.vmem [#allocation2], %s215
        %p217 = pneg %p54
        %p218 = pneg %p51
        %p219 = pneg %p80
        %p220 = pneg %p77
        %p221 = scmp.lt.s32.totalorder %s26, 0
        %s222 = scalar_select %p221, %s26, 0
        %s223 = scalar_lea.vmem %s2, %s222
        %p224 = pneg %p106
        %p225 = pneg %p103
        %p226 = pneg %p134
        %p227 = pneg %p131
        %s228 = sand.u32 %s121, 1
        %s229 = scalar_lea.sflag [#allocation4], %s228
        %s230 = sand.u32 %s121, 1
        %s231 = smul.addr %s230, 8
        %s232 = scalar_lea.vmem [#allocation7], %s231
        %p233 = scmp.lt.s32.totalorder %s26, 0
        %s234 = scalar_select %p233, %s26, 0
        %s235 = scalar_lea.vmem %s2, %s234
        %v236 = vld [vmem:[%s203] sm:$0xff]
        %v237 = vld [vmem:[#allocation5] sm:$0xff]
        %v238 = vld [vmem:[#allocation5 + $0x8] sm:$0xff]
        %v239 = vld [vmem:[#allocation5 + $0x10] sm:$0xff]
        %v240 = vld [vmem:[#allocation5 + $0x18] sm:$0xff]
        %v241 = vld [vmem:[#allocation5 + $0x20] sm:$0xff]
        %v242 = vld [vmem:[#allocation5 + $0x28] sm:$0xff]
        %v243 = vld [vmem:[#allocation5 + $0x30] sm:$0xff]
        %v244 = vld [vmem:[#allocation5 + $0x38] sm:$0xff]
        %v245 = vld [vmem:[#allocation5 + $0x40] sm:$0xff]
        %v246 = vld [vmem:[#allocation5 + $0x48] sm:$0xff]
        %v247 = vld [vmem:[#allocation5 + $0x50] sm:$0xff]
        %v248 = vld [vmem:[#allocation5 + $0x58] sm:$0xff]
        %v249 = vld [vmem:[#allocation5 + $0x60] sm:$0xff]
        %v250 = vld [vmem:[#allocation5 + $0x68] sm:$0xff]
        %v251 = vld [vmem:[#allocation5 + $0x70] sm:$0xff]
        %v252 = vld [vmem:[#allocation5 + $0x78] sm:$0xff]
        %v253 = vld [vmem:[%s235] sm:$0x1]
        %v255 = vlaneseq
        %v256 = vshrl.u32 %v255, 7
        %v257 = vsub.s32 0, %v256
        %v258 = vrot.slane %v253, %v257
        %260 = vmatprep.subr.mxu0 0.0
        %261 = vmatpush1.msra.mxu0 %v237
        %262 = vmatprep.subr.mxu0 0.0
        %263 = vmatpush1.msra.mxu0 %v238
        %264 = vmatprep.subr.mxu0 0.0
        %265 = vmatpush1.msra.mxu0 %v239
        %266 = vmatprep.subr.mxu0 0.0
        %267 = vmatpush1.msra.mxu0 %v240
        %268 = vmatprep.subr.mxu0 0.0
        %269 = vmatpush1.msra.mxu0 %v241
        %270 = vmatprep.subr.mxu0 0.0
        %271 = vmatpush1.msra.mxu0 %v242
        %272 = vmatprep.subr.mxu0 0.0
        %273 = vmatpush1.msra.mxu0 %v243
        %274 = vmatprep.subr.mxu0 0.0
        %275 = vmatpush1.msra.mxu0 %v244
        %276 = vmatprep.subr.mxu0 0.0
        %277 = vmatpush1.msra.mxu0 %v245
        %278 = vmatprep.subr.mxu0 0.0
        %279 = vmatpush1.msra.mxu0 %v246
        %280 = vmatprep.subr.mxu0 0.0
        %281 = vmatpush1.msra.mxu0 %v247
        %282 = vmatprep.subr.mxu0 0.0
        %283 = vmatpush1.msra.mxu0 %v248
        %284 = vmatprep.subr.mxu0 0.0
        %285 = vmatpush1.msra.mxu0 %v249
        %286 = vmatprep.subr.mxu0 0.0
        %287 = vmatpush1.msra.mxu0 %v250
        %288 = vmatprep.subr.mxu0 0.0
        %289 = vmatpush1.msra.mxu0 %v251
        %290 = vmatprep.subr.mxu0 0.0
        %291 = vmatpush1.msra.mxu0 %v252
        %292 = vmatprep.subr.mxu0 0.0
        %293 = vmatpush1.msra.mxu0 0.0
        %294 = vmatprep.subr.mxu0 0.0
        %295 = vmatpush1.msra.mxu0 0.0
        %296 = vmatprep.subr.mxu0 0.0
        %297 = vmatpush1.msra.mxu0 0.0
        %298 = vmatprep.subr.mxu0 0.0
        %299 = vmatpush1.msra.mxu0 0.0
        %300 = vmatprep.subr.mxu0 0.0
        %301 = vmatpush1.msra.mxu0 0.0
        %302 = vmatprep.subr.mxu0 0.0
        %303 = vmatpush1.msra.mxu0 0.0
        %304 = vmatprep.subr.mxu0 0.0
        %305 = vmatpush1.msra.mxu0 0.0
        %306 = vmatprep.subr.mxu0 0.0
        %307 = vmatpush1.msra.mxu0 0.0
        %308 = vmatprep.subr.mxu0 0.0
        %309 = vmatpush1.msra.mxu0 0.0
        %310 = vmatprep.subr.mxu0 0.0
        %311 = vmatpush1.msra.mxu0 0.0
        %312 = vmatprep.subr.mxu0 0.0
        %313 = vmatpush1.msra.mxu0 0.0
        %314 = vmatprep.subr.mxu0 0.0
        %315 = vmatpush1.msra.mxu0 0.0
        %316 = vmatprep.subr.mxu0 0.0
        %317 = vmatpush1.msra.mxu0 0.0
        %318 = vmatprep.subr.mxu0 0.0
        %319 = vmatpush1.msra.mxu0 0.0
        %320 = vmatprep.subr.mxu0 0.0
        %321 = vmatpush1.msra.mxu0 0.0
        %322 = vmatprep.subr.mxu0 0.0
        %323 = vmatpush1.msra.mxu0 0.0
        %324 = vmatprep.mubr.f32.mxu0 0.0
        %325 = vmatmul.mubr.f32.gmra.mrb[0].mxu0 %v236
        %v326 = vpop.f32.mrb[0].mxu0
        %v327 = vadd.f32 %v258, %v326
        %v328 = vpop.f32.mrb[0].mxu0
        %329 = vdwg.mxu0
        %s330 = smul.u32 %s26, 128
        %s331 = sshra.s32 %s330, 7
        %s332 = sand.u32 %s330, 127
        %s333 = scalar_lea.vmem %s203, %s331 [#allocation2]
        %v334 = vld [vmem:[%s333] sm:$0xff]
        %v335 = vadd.f32 %v327, %v334
        %336 = vst [vmem:[%s232] sm:$0xff] %v335
        %s337 = sand.u32 %s121, 1
        %s338 = scalar_lea.sflag [#allocation4], %s337
        %s339 = sand.u32 %s121, 1
        %s340 = smul.addr %s339, 8
        %s341 = scalar_lea.vmem [#allocation7], %s340
        // Predicated region
        $region41: #{tpu_custom_call.1} parent=31 // pred_check
          %p342 = pneg %p131
        $region42: #{tpu_custom_call.1} parent=31 // pred_check_branch
          %344 = sbr.rel (%p342) target = $region44
        $region43: #{tpu_custom_call.1} parent=31 // pred_region
          %s346 = ssub.s32 128, 128
          %347 = vsyncadd %s338, %s346
          %s348 = sadd.s32 %s26, %s25
          %s349 = smul.addr %s348, 128
          %s350 = scalar_lea.hbm %s3, %s349
          %s352 = sshll.u32 %s341, 4
          %s353 = int_to_ptr.vmem [resolvable:$true] %s352
          %355 = dma.vmem_to_hbm [thread:$0]  %s353, 128, %s350, %s338
        $region44: #{tpu_custom_call.1} parent=31 // pred_fallthru
          _
      $region32: #{tpu_custom_call.1} parent=5 // pred_fallthru
        _
      %p356 = scmp.le.s32.totalorder 2, %s16
      // Predicated region
      $region45: #{tpu_custom_call.1} parent=5 // pred_check
        %p357 = pneg %p356
      $region46: #{tpu_custom_call.1} parent=5 // pred_check_branch
        %359 = sbr.rel (%p357) target = $region48
      $region47: #{tpu_custom_call.1} parent=5 // pred_region
        %s360 = ssub.s32 %s16, 2
        // Predicated region
        $region49: #{tpu_custom_call.1} parent=47 // pred_check
          %p361 = pneg %p137
        $region50: #{tpu_custom_call.1} parent=47 // pred_check_branch
          %363 = sbr.rel (%p361) target = $region52
        $region51: #{tpu_custom_call.1} parent=47 // pred_region
          %s364 = sand.u32 %s122, 1
          %s365 = scalar_lea.sflag [#allocation4], %s364
          %s366 = sand.u32 %s122, 1
          %s367 = smul.addr %s366, 8
          %s368 = scalar_lea.vmem [#allocation7], %s367
          %369 = dma.done %s365, 128
        $region52: #{tpu_custom_call.1} parent=47 // pred_fallthru
          _
      $region48: #{tpu_custom_call.1} parent=5 // pred_fallthru
        _
    $region6: #{tpu_custom_call.1} parent=1 // loop_footer
      %s20 = sadd.s32 1, %s16
    $region7: #{tpu_custom_call.1} parent=1 // loop_footer_branch
      %15 = sbr.rel target = $region3
    $region8: #{tpu_custom_call.1} parent=1 // loop_exit
      _
    %370 = vsyncpa [#allocation3], 1
    %s371 = scalar_lea.sflag [#allocation3], 1
    %372 = vsyncpa %s371, 1
    %373 = vsyncpa [#allocation6], 1
    %374 = vsyncpa [#allocation4], 1
    %s375 = scalar_lea.sflag [#allocation4], 1
    %376 = vsyncpa %s375, 1

</llo_original>
